<compile_context>
chip_gen: v5e
topology: v5e:2x2
jax: 0.10.0
libtpu: 0.0.40
codegen_flags: <defaults>
</compile_context>

<pallas_src>
import functools

import jax
import jax.numpy as jnp
from jax.experimental import pallas as pl
from jax.experimental.pallas import tpu as pltpu


_MIN_BLOCKS = 4                       # >= max(4, 2 * TensorCores) -> covers v7x megacore
_TEMP_BYTES = 4 * 1024 * 1024         # budget for the per-chunk f32 temporaries


def _cdiv(a, b):
    return -(-a // b)


def _round_up(a, b):
    return _cdiv(a, b) * b


def _vmem_capacity_bytes():
    try:
        cap = getattr(pltpu.get_tpu_info(), "vmem_capacity_bytes", None)
        if cap:
            return int(cap)
    except Exception:
        pass
    return 64 * 1024 * 1024           # conservative fallback (v7x per-TC VMEM)


def _plan(nc, l_pad, itemsize):
    """Pick (planes_per_block, chunk, steps, num_blocks, vmem_limit) from PADDED bytes."""
    vmem_cap = _vmem_capacity_bytes()
    # ~4 MiB input blocks on 128 MiB chips (v5e/v6e), ~2 MiB on v7x (64 MiB VMEM).
    target = min(max(vmem_cap // 32, 1 << 20), 8 << 20)

    sub = 8 if itemsize >= 4 else (16 if itemsize == 2 else 32)   # sublane tile
    row_bytes = l_pad * itemsize                  # lane-padded footprint of one plane
    b_budget = max(1, target // row_bytes)
    if b_budget > sub:
        b_budget = (b_budget // sub) * sub        # keep big blocks sublane-aligned

    num_blocks = max(_MIN_BLOCKS, _cdiv(nc, b_budget))
    b = _cdiv(nc, num_blocks)                     # balanced planes per block
    # Streaming chunk: at most one sublane tile, bounded by the f32 temporaries.
    chunk = max(1, min(sub, _TEMP_BYTES // (8 * l_pad * 4), b))
    b = _round_up(b, chunk)
    steps = b // chunk

    block_vmem = _round_up(b, sub) * row_bytes    # padded (sublane x lane) block footprint
    need = 2 * block_vmem + 8 * chunk * l_pad * 4 + 4 * l_pad * 4 + (1 << 20)
    vmem_limit = int(min(max(need, vmem_cap // 4), int(0.9 * vmem_cap)))
    return b, chunk, steps, num_blocks, vmem_limit


def _tv_kernel(m_ref, x_ref, o_ref, *, w, chunk, steps, has_h, has_w):
    # m_ref: (2, l_pad) f32 boundary masks (row 0: H-term, row 1: W-term).
    # x_ref: (b, l_pad) block of flattened, lane-padded planes.
    # o_ref: (2, 128) per-block partial sums (lane-dense, single unmasked store).
    mask_h = m_ref[0:1, :]            # hoisted: loaded once, broadcast over chunks
    mask_w = m_ref[1:2, :]
    pow2 = (chunk & (chunk - 1)) == 0

    def body(s, carry):
        h_acc, w_acc = carry
        off = s * chunk
        if pow2:
            off = pl.multiple_of(off, chunk)
        # Per-chunk cast keeps f32 temporaries to a few sublane tiles (no
        # block-sized temporaries; v5e-friendly bf16->f32 cast folded in here).
        xc = x_ref[pl.ds(off, chunk), :].astype(jnp.float32)
        if has_w:
            # Lane rotate by -1 (== jnp.roll(xc, -1, axis=1)): xr[j] = xc[j+1].
            # Wrap lane and row-boundary lanes are zeroed by mask_w.
            xr = jnp.concatenate([xc[:, 1:], xc[:, :1]], axis=1)
            d = (xr - xc) * mask_w
            w_acc = w_acc + jnp.sum(d * d).reshape(1, 1)
        if has_h:
            # Lane rotate by -w: xd[j] = xc[j+w]; last w lanes per plane masked.
            xd = jnp.concatenate([xc[:, w:], xc[:, :w]], axis=1)
            d = (xd - xc) * mask_h
            h_acc = h_acc + jnp.sum(d * d).reshape(1, 1)
        return h_acc, w_acc

    zero = jnp.zeros((1, 1), jnp.float32)
    h_tv, w_tv = jax.lax.fori_loop(
        0, steps, body, (zero, zero), unroll=True if steps <= 8 else 8)
    # Single unmasked (2, 128) store of both partials.
    o_ref[...] = jnp.concatenate(
        [jnp.broadcast_to(h_tv, (1, 128)), jnp.broadcast_to(w_tv, (1, 128))], axis=0)


def tv_loss(x):
    """x: (N, C, H, W) array. Returns scalar float32 TV loss (PyTorch semantics)."""
    n, c, h, w = x.shape
    count_h = (h - 1) * w
    count_w = h * (w - 1)

    nc = n * c
    l_valid = h * w
    l_pad = _round_up(l_valid, 128)
    itemsize = jnp.dtype(x.dtype).itemsize
    b, chunk, steps, num_blocks, vmem_limit = _plan(nc, l_pad, itemsize)

    # Flatten planes; pad lanes to a multiple of 128 and planes to num_blocks*b.
    # Zero planes / zero lanes contribute exactly 0 to both TV terms.
    x_flat = x.reshape(nc, l_valid)
    pad_rows = num_blocks * b - nc
    pad_cols = l_pad - l_valid
    if pad_rows or pad_cols:
        x_flat = jnp.pad(x_flat, ((0, pad_rows), (0, pad_cols)))
    x_blocks = x_flat.reshape(num_blocks, b, l_pad)

    # Boundary masks, computed once and shared by every grid step / chunk.
    idx = jnp.arange(l_pad, dtype=jnp.int32)
    mask_h = (idx < (h - 1) * w).astype(jnp.float32)
    mask_w = jnp.logical_and(idx % w != (w - 1), idx < l_valid).astype(jnp.float32)
    masks = jnp.stack([mask_h, mask_w], axis=0)            # (2, l_pad)

    kernel = functools.partial(
        _tv_kernel, w=w, chunk=chunk, steps=steps, has_h=h > 1, has_w=w > 1)

    cost = pl.CostEstimate(
        flops=6 * nc * h * w,
        transcendentals=0,
        bytes_accessed=(num_blocks * b * l_pad * itemsize
                        + 2 * l_pad * 4 + num_blocks * 2 * 128 * 4),
    )

    partials = pl.pallas_call(
        kernel,
        out_shape=jax.ShapeDtypeStruct((num_blocks, 2, 128), jnp.float32),
        grid_spec=pltpu.PrefetchScalarGridSpec(
            num_scalar_prefetch=0,
            grid=(num_blocks,),
            in_specs=[
                pl.BlockSpec((2, l_pad), lambda i: (0, 0)),
                pl.BlockSpec((None, b, l_pad), lambda i: (i, 0, 0)),
            ],
            out_specs=pl.BlockSpec((None, 2, 128), lambda i: (i, 0, 0)),
        ),
        compiler_params=pltpu.CompilerParams(
            dimension_semantics=("parallel",),
            vmem_limit_bytes=vmem_limit,
        ),
        cost_estimate=cost,
    )(masks, x_blocks)

    h_tv = jnp.sum(partials[:, 0, 0])
    w_tv = jnp.sum(partials[:, 1, 0])
    # NOTE: intentionally matches PyTorch, incl. inf/nan when H == 1 or W == 1.
    return 2.0 * (h_tv / count_h + w_tv / count_w)


def tv_loss_ref(x):
    h = x.shape[2]
    w = x.shape[3]
    count_h = (h - 1) * w
    count_w = h * (w - 1)
    xf = x.astype(jnp.float32)
    h_tv = jnp.sum((xf[:, :, 1:, :] - xf[:, :, :-1, :]) ** 2)
    w_tv = jnp.sum((xf[:, :, :, 1:] - xf[:, :, :, :-1]) ** 2)
    return 2.0 * (h_tv / count_h + w_tv / count_w)


if __name__ == "__main__":
    key = jax.random.PRNGKey(0)
    x = jax.random.normal(key, (2, 4, 16, 16), dtype=jnp.float32)

    out = jax.block_until_ready(tv_loss(x))
    ref = jax.block_until_ready(tv_loss_ref(x))

    assert jnp.allclose(out, ref, rtol=1e-5, atol=1e-5), (out, ref)
    print("KERNEL_OK")
</pallas_src>

<mosaic_0001>
module attributes {stable_mosaic.version = 11 : i64} {
  func.func @_tv_kernel(%arg0: i32, %arg1: memref<2x256xf32, #tpu.memory_space<vmem>>, %arg2: memref<1x2x256xf32, #tpu.memory_space<vmem>>, %arg3: memref<1x2x128xf32, #tpu.memory_space<vmem>>) attributes {dimension_semantics = [#tpu.dimension_semantics<parallel>], iteration_bounds = array<i64: 4>, scalar_prefetch = 0 : i64, scratch_operands = 0 : i64, tpu.core_type = #tpu.core_type<tc>, window_params = [{pipeline_mode = #tpu.pipeline_mode<synchronous>, transform_indices = @transform_0, window_bounds = array<i64: 2, 256>}, {transform_indices = @transform_1, window_bounds = array<i64: 1, 2, 256>}, {transform_indices = @transform_2, window_bounds = array<i64: 1, 2, 128>}]} {
    %c0 = arith.constant 0 : index
    %c0_0 = arith.constant 0 : index
    %0 = vector.load %arg1[%c0, %c0_0] : memref<2x256xf32, #tpu.memory_space<vmem>>, vector<1x256xf32>
    %c1 = arith.constant 1 : index
    %c0_1 = arith.constant 0 : index
    %1 = vector.load %arg1[%c1, %c0_1] : memref<2x256xf32, #tpu.memory_space<vmem>>, vector<1x256xf32>
    %cst = arith.constant 0.000000e+00 : f32
    %2 = vector.broadcast %cst : f32 to vector<1x1xf32>
    %c0_i32 = arith.constant 0 : i32
    %c2_i32 = arith.constant 2 : i32
    %3 = arith.muli %c0_i32, %c2_i32 : i32
    %4 = tpu.assume_multiple %3, 2 : i32
    %c0_2 = arith.constant 0 : index
    %5 = arith.index_cast %4 : i32 to index
    %c0_3 = arith.constant 0 : index
    %6 = vector.load %arg2[%c0_2, %5, %c0_3] : memref<1x2x256xf32, #tpu.memory_space<vmem>>, vector<1x2x256xf32>
    %7 = vector.shape_cast %6 : vector<1x2x256xf32> to vector<2x256xf32>
    %8 = vector.extract_strided_slice %7 {offsets = [0, 1], sizes = [2, 255], strides = [1, 1]} : vector<2x256xf32> to vector<2x255xf32>
    %9 = vector.extract_strided_slice %7 {offsets = [0, 0], sizes = [2, 1], strides = [1, 1]} : vector<2x256xf32> to vector<2x1xf32>
    %10 = tpu.concatenate %8, %9 in 1 : vector<2x255xf32>, vector<2x1xf32> -> vector<2x256xf32>
    %11 = arith.subf %10, %7 : vector<2x256xf32>
    %12 = vector.broadcast %1 : vector<1x256xf32> to vector<2x256xf32>
    %13 = arith.mulf %11, %12 : vector<2x256xf32>
    %14 = arith.mulf %13, %13 : vector<2x256xf32>
    %15 = vector.shape_cast %14 : vector<2x256xf32> to vector<1x2x256xf32>
    %cst_4 = arith.constant dense<0.000000e+00> : vector<1xf32>
    %16 = vector.multi_reduction <add>, %15, %cst_4 [1, 2] : vector<1x2x256xf32> to vector<1xf32>
    %17 = vector.shape_cast %16 : vector<1xf32> to vector<1x1x1xf32>
    %18 = vector.extract %17[0, 0, 0] : f32 from vector<1x1x1xf32>
    %19 = vector.broadcast %18 : f32 to vector<1x1xf32>
    %20 = arith.addf %2, %19 : vector<1x1xf32>
    %21 = vector.extract_strided_slice %7 {offsets = [0, 16], sizes = [2, 240], strides = [1, 1]} : vector<2x256xf32> to vector<2x240xf32>
    %22 = vector.extract_strided_slice %7 {offsets = [0, 0], sizes = [2, 16], strides = [1, 1]} : vector<2x256xf32> to vector<2x16xf32>
    %23 = tpu.concatenate %21, %22 in 1 : vector<2x240xf32>, vector<2x16xf32> -> vector<2x256xf32>
    %24 = arith.subf %23, %7 : vector<2x256xf32>
    %25 = vector.broadcast %0 : vector<1x256xf32> to vector<2x256xf32>
    %26 = arith.mulf %24, %25 : vector<2x256xf32>
    %27 = arith.mulf %26, %26 : vector<2x256xf32>
    %28 = vector.shape_cast %27 : vector<2x256xf32> to vector<1x2x256xf32>
    %cst_5 = arith.constant dense<0.000000e+00> : vector<1xf32>
    %29 = vector.multi_reduction <add>, %28, %cst_5 [1, 2] : vector<1x2x256xf32> to vector<1xf32>
    %30 = vector.shape_cast %29 : vector<1xf32> to vector<1x1x1xf32>
    %31 = vector.extract %30[0, 0, 0] : f32 from vector<1x1x1xf32>
    %32 = vector.broadcast %31 : f32 to vector<1x1xf32>
    %33 = arith.addf %2, %32 : vector<1x1xf32>
    %c1_i32 = arith.constant 1 : i32
    %34 = vector.shape_cast %33 : vector<1x1xf32> to vector<1x1xf32>
    %35 = vector.broadcast %34 : vector<1x1xf32> to vector<1x128xf32>
    %36 = vector.shape_cast %20 : vector<1x1xf32> to vector<1x1xf32>
    %37 = vector.broadcast %36 : vector<1x1xf32> to vector<1x128xf32>
    %38 = tpu.concatenate %35, %37 in 0 : vector<1x128xf32>, vector<1x128xf32> -> vector<2x128xf32>
    %c0_6 = arith.constant 0 : index
    %c0_7 = arith.constant 0 : index
    %c0_8 = arith.constant 0 : index
    %39 = vector.load %arg3[%c0_6, %c0_7, %c0_8] : memref<1x2x128xf32, #tpu.memory_space<vmem>>, vector<1x2x128xf32>
    %40 = vector.shape_cast %39 : vector<1x2x128xf32> to vector<2x128xf32>
    %41 = vector.shape_cast %38 : vector<2x128xf32> to vector<1x2x128xf32>
    tpu.vector_store %arg3[%c0_6, %c0_7, %c0_8], %41 {strides = array<i32>} : memref<1x2x128xf32, #tpu.memory_space<vmem>>, vector<1x2x128xf32>,
    return
  }
  func.func @transform_0(%arg0: i32) -> (i32, i32) {
    %c0_i32 = arith.constant 0 : i32
    %c0_i32_0 = arith.constant 0 : i32
    %c0_i32_1 = arith.constant 0 : i32
    return %c0_i32, %c0_i32_0 : i32, i32
  }
  func.func @transform_1(%arg0: i32) -> (i32, i32, i32) {
    %c0_i32 = arith.constant 0 : i32
    %c0_i32_0 = arith.constant 0 : i32
    %c0_i32_1 = arith.constant 0 : i32
    return %arg0, %c0_i32, %c0_i32_0 : i32, i32, i32
  }
  func.func @transform_2(%arg0: i32) -> (i32, i32, i32) {
    %c0_i32 = arith.constant 0 : i32
    %c0_i32_0 = arith.constant 0 : i32
    %c0_i32_1 = arith.constant 0 : i32
    return %arg0, %c0_i32, %c0_i32_0 : i32, i32, i32
  }
}

</mosaic_0001>

<llo_original>
// kernel: tpu_custom_call.1
$region0: #{tpu_custom_call.1}
  #allocation0 [shape = 'u32[]', space=smem, size = 0x4, offset = 0x4, fixed_abs, tag = 'smem constant byte address 0x4 - core index']
  #allocation1 [shape = 'u32[72,128]{1,0:T(1,128)}', space=vmem, size = 0x9000, scoped, tag = 'internal scratch']
  %s0 = inlined_call_operand.hbm [shape: f32[2,256], index: 0, kind: input, shape index: {}]
  %s1 = inlined_call_operand.hbm [shape: f32[4,2,256], index: 1, kind: input, shape index: {}]
  %s2 = inlined_call_operand.hbm [shape: f32[4,2,128], index: 2, kind: output, shape index: {}]
  %s3 = sld [smem:[#allocation0]]
  $region49: #{tpu_custom_call.1} parent=0
    _
  %s5 = ssub.s32 1, %s3
  %s6 = scalar_select 0, %s5, %s3
  $region1: #{tpu_custom_call.1} parent=0
    #allocation2 [shape = 'u8[2048]{0}', space=vmem, size = 0x800, scoped, tag = 'input window, operand 0, single buffered']
    #allocation3 [shape = 's32[2]{0}', space=sflag, size = 0x8, scoped, tag = 'scoped memory for tpu_custom_call.1']
    #allocation4 [shape = 's32[2]{0}', space=sflag, size = 0x8, scoped, tag = 'scoped memory for tpu_custom_call.1']
    #allocation5 [shape = 'u8[4096]{0}', space=vmem, size = 0x1000, scoped, tag = 'input window, operand 1']
    #allocation6 [shape = 's32[2]{0}', space=sflag, size = 0x8, scoped, tag = 'scoped memory for tpu_custom_call.1']
    #allocation7 [shape = 'u8[2048]{0}', space=vmem, size = 0x800, scoped, tag = 'output window, operand 0']
    %7 = vsyncpa [#allocation3], 0
    %8 = vsyncpa [#allocation6], 0
    %s9 = scalar_lea.sflag [#allocation6], 1
    %10 = vsyncpa %s9, 0
    %11 = vsyncpa [#allocation4], 0
    %s12 = scalar_lea.sflag [#allocation4], 1
    %13 = vsyncpa %s12, 0
    loop: start=0, step=1, limit=6
    $region2: #{tpu_custom_call.1} parent=1 // loop_pre_header
      _
    $region3: #{tpu_custom_call.1} parent=1 // loop_header
      %s15 = sphi 0, %s19
      %p16 = scmp.ge.s32.totalorder %s15, 6
      %s23 = sphi 0, %s23
      %s25 = sphi 0, %s23
      %s26 = sphi 0, %s25
      %s40 = sphi 0, %s26
      %s46 = sphi 0, %s48
      %s49 = sphi 0, %s46
      %s50 = sphi 0, %s49
      %s66 = sphi 0, %s50
      %s72 = sphi 0, %s74
      %s75 = sphi 0, %s72
      %s76 = sphi 0, %s75
      %s92 = sphi 0, %s76
    $region4: #{tpu_custom_call.1} parent=1 // loop_header_branch
      %18 = sbr.rel (%p16) target = $region8
    $region5: #{tpu_custom_call.1} parent=1 // loop_body
      %s20 = ssub.s32 %s15, 1
      %s21 = ssub.s32 %s15, 2
      %s22 = sadd.s32 %s15, 1
      %s24 = sadd.s32 %s23, 1
      %p27 = scmp.eq.s32.totalorder %s15, 3
      %p28 = scmp.ne.s32.totalorder %s23, %s25
      %p29 = scmp.eq.s32.totalorder %s15, 0
      %p30 = por %p28, %p29
      %p31 = scmp.ne.s32.totalorder %s23, %s25
      %p32 = scmp.eq.s32.totalorder %s20, 3
      %p33 = por %p31, %p32
      %p34 = scmp.ne.s32.totalorder %s25, %s26
      %p35 = scmp.eq.s32.totalorder %s20, 0
      %p36 = por %p34, %p35
      %p37 = scmp.ne.s32.totalorder %s25, %s26
      %p38 = scmp.eq.s32.totalorder %s21, 3
      %p39 = por %p37, %p38
      %p41 = scmp.ne.s32.totalorder %s26, %s40
      %p42 = scmp.eq.s32.totalorder %s21, 0
      %p43 = por %p41, %p42
      %s44 = ssub.s32 %s15, %s22
      %p45 = scmp.eq.s32.totalorder %s44, 0
      %s47 = sadd.s32 %s46, 1
      %s48 = scalar_select %p45, %s46, %s47
      %p51 = pneg %p45
      %p52 = scmp.eq.s32.totalorder %s15, 3
      %p53 = por %p51, %p52
      %p54 = scmp.ne.s32.totalorder %s46, %s49
      %p55 = scmp.eq.s32.totalorder %s15, 0
      %p56 = por %p54, %p55
      %p57 = scmp.ne.s32.totalorder %s46, %s49
      %p58 = scmp.eq.s32.totalorder %s20, 3
      %p59 = por %p57, %p58
      %p60 = scmp.ne.s32.totalorder %s49, %s50
      %p61 = scmp.eq.s32.totalorder %s20, 0
      %p62 = por %p60, %p61
      %p63 = scmp.ne.s32.totalorder %s49, %s50
      %p64 = scmp.eq.s32.totalorder %s21, 3
      %p65 = por %p63, %p64
      %p67 = scmp.ne.s32.totalorder %s50, %s66
      %p68 = scmp.eq.s32.totalorder %s21, 0
      %p69 = por %p67, %p68
      %s70 = ssub.s32 %s15, %s22
      %p71 = scmp.eq.s32.totalorder %s70, 0
      %s73 = sadd.s32 %s72, 1
      %s74 = scalar_select %p71, %s72, %s73
      %p77 = pneg %p71
      %p78 = scmp.eq.s32.totalorder %s15, 3
      %p79 = por %p77, %p78
      %p80 = scmp.ne.s32.totalorder %s72, %s75
      %p81 = scmp.eq.s32.totalorder %s15, 0
      %p82 = por %p80, %p81
      %p83 = scmp.ne.s32.totalorder %s72, %s75
      %p84 = scmp.eq.s32.totalorder %s20, 3
      %p85 = por %p83, %p84
      %p86 = scmp.ne.s32.totalorder %s75, %s76
      %p87 = scmp.eq.s32.totalorder %s20, 0
      %p88 = por %p86, %p87
      %p89 = scmp.ne.s32.totalorder %s75, %s76
      %p90 = scmp.eq.s32.totalorder %s21, 3
      %p91 = por %p89, %p90
      %p93 = scmp.ne.s32.totalorder %s76, %s92
      %p94 = scmp.eq.s32.totalorder %s21, 0
      %p95 = por %p93, %p94
      %p96 = scmp.le.s32.totalorder 1, %s15
      %p97 = scmp.lt.s32.totalorder %s15, 5
      %p98 = pnand %p96, %p97
      %p99 = pneg %p98
      // Predicated region
      $region9: #{tpu_custom_call.1} parent=5 // pred_check
        _
      $region10: #{tpu_custom_call.1} parent=5 // pred_check_branch
        %101 = sbr.rel (%p98) target = $region12
      $region11: #{tpu_custom_call.1} parent=5 // pred_region
        %s102 = ssub.s32 %s15, 1
        // Predicated region
        $region13: #{tpu_custom_call.1} parent=11 // pred_check
          %p103 = pneg %p36
        $region14: #{tpu_custom_call.1} parent=11 // pred_check_branch
          %105 = sbr.rel (%p103) target = $region16
        $region15: #{tpu_custom_call.1} parent=11 // pred_region
          %107 = vsyncadd [#allocation3], 0
          %s109 = sshll.u32 %s0, 4
          %s110 = int_to_ptr.hbm [resolvable:$true] %s109
          %s111 = sshll.u32 [#allocation2], 4
          %s112 = int_to_ptr.vmem [resolvable:$true] %s111
          %114 = dma.hbm_to_vmem [thread:$0]  %s110, 64, %s112, [#allocation3]
        $region16: #{tpu_custom_call.1} parent=11 // pred_fallthru
          _
      $region12: #{tpu_custom_call.1} parent=5 // pred_fallthru
        _
      %p115 = scmp.lt.s32.totalorder %s15, 4
      // Predicated region
      $region17: #{tpu_custom_call.1} parent=5 // pred_check
        %p116 = pneg %p115
      $region18: #{tpu_custom_call.1} parent=5 // pred_check_branch
        %118 = sbr.rel (%p116) target = $region20
      $region19: #{tpu_custom_call.1} parent=5 // pred_region
        // Predicated region
        $region21: #{tpu_custom_call.1} parent=19 // pred_check
          %p119 = pneg %p56
        $region22: #{tpu_custom_call.1} parent=19 // pred_check_branch
          %121 = sbr.rel (%p119) target = $region24
        $region23: #{tpu_custom_call.1} parent=19 // pred_region
          %s122 = sand.u32 %s46, 1
          %s123 = scalar_lea.sflag [#allocation6], %s122
          %s124 = sand.u32 %s46, 1
          %s125 = smul.addr %s124, 4
          %s126 = scalar_lea.vmem [#allocation5], %s125
          %128 = vsyncadd %s123, 0
          %s129 = smul.addr %s15, 2
          %s130 = smul.addr %s129, 2
          %s131 = scalar_lea.hbm %s1, %s130
          %s133 = sshll.u32 %s131, 4
          %s134 = int_to_ptr.hbm [resolvable:$true] %s133
          %s135 = sshll.u32 %s126, 4
          %s136 = int_to_ptr.vmem [resolvable:$true] %s135
          %138 = dma.hbm_to_vmem [thread:$0]  %s134, 64, %s136, %s123
        $region24: #{tpu_custom_call.1} parent=19 // pred_fallthru
          _
      $region20: #{tpu_custom_call.1} parent=5 // pred_fallthru
        _
      %p139 = scmp.le.s32.totalorder 1, %s15
      %p140 = scmp.lt.s32.totalorder %s15, 5
      %p141 = pnand %p139, %p140
      %p142 = pneg %p141
      // Predicated region
      $region25: #{tpu_custom_call.1} parent=5 // pred_check
        _
      $region26: #{tpu_custom_call.1} parent=5 // pred_check_branch
        %144 = sbr.rel (%p141) target = $region28
      $region27: #{tpu_custom_call.1} parent=5 // pred_region
        %s145 = ssub.s32 %s15, 1
        // Predicated region
        $region29: #{tpu_custom_call.1} parent=27 // pred_check
          %p146 = pneg %p36
        $region30: #{tpu_custom_call.1} parent=27 // pred_check_branch
          %148 = sbr.rel (%p146) target = $region32
        $region31: #{tpu_custom_call.1} parent=27 // pred_region
          %150 = dma.done [#allocation3], 64
        $region32: #{tpu_custom_call.1} parent=27 // pred_fallthru
          _
        %s151 = sand.u32 %s49, 1
        %s152 = scalar_lea.sflag [#allocation6], %s151
        %s153 = sand.u32 %s49, 1
        %s154 = smul.addr %s153, 4
        %s155 = scalar_lea.vmem [#allocation5], %s154
        // Predicated region
        $region33: #{tpu_custom_call.1} parent=27 // pred_check
          %p156 = pneg %p62
        $region34: #{tpu_custom_call.1} parent=27 // pred_check_branch
          %158 = sbr.rel (%p156) target = $region36
        $region35: #{tpu_custom_call.1} parent=27 // pred_region
          %160 = dma.done %s152, 64
        $region36: #{tpu_custom_call.1} parent=27 // pred_fallthru
          _
        %p161 = pneg %p36
        %p162 = pneg %p33
        %s163 = sand.u32 %s49, 1
        %s164 = scalar_lea.sflag [#allocation6], %s163
        %s165 = sand.u32 %s49, 1
        %s166 = smul.addr %s165, 4
        %s167 = scalar_lea.vmem [#allocation5], %s166
        %p168 = pneg %p62
        %p169 = pneg %p59
        %p170 = pneg %p88
        %p171 = pneg %p85
        %s172 = sand.u32 %s75, 1
        %s173 = scalar_lea.sflag [#allocation4], %s172
        %s174 = sand.u32 %s75, 1
        %s175 = smul.addr %s174, 2
        %s176 = scalar_lea.vmem [#allocation7], %s175
        %v177 = vld [vmem:[#allocation2] ss:$2 sm:$0x3]
        %s178 = scalar_lea.vmem [#allocation2], 1
        %v179 = vld [vmem:[%s178] ss:$2 sm:$0x3]
        %s180 = smul.u32 0, 2
        %s181 = smul.addr %s180, 2
        %s182 = scalar_lea.vmem %s155, %s181 [#allocation5]
        %v183 = vld [vmem:[%s182] sm:$0xf]
        %185 = vst [vmem:[#allocation1] ss:$4 sm:$0xff] %v183
        %v186 = vld.sshfl [vmem:[#allocation1] sm:$0xff pattern:$0x73625140]
        %v187 = vld.sshfl [vmem:[#allocation1 + $0x8] sm:$0xff pattern:$0x73625140]
        %188 = vrot.lane.b32.xlu0 %v186, 127
        %v189 = vpop.permute.xlu0 %188
        %190 = vrot.lane.b32.xlu0 %v187, 127
        %v191 = vpop.permute.xlu0 %190
        %vm192 = vcmask 1039360
        %v193 = vsel %vm192, %v189, %v191
        %196 = vst [vmem:[#allocation1] ss:$4 sm:$0xff] %v183
        %v197 = vld.sshfl [vmem:[#allocation1] sm:$0xff pattern:$0x73625140]
        %198 = vrot.lane.b32.xlu0 %v197, 127
        %v199 = vpop.permute.xlu0 %198
        %v201 = vsel %vm192, %v191, %v199
        %202 = vst [vmem:[#allocation1] ss:$4 sm:$0xff] %v183
        %v203 = vld.sshfl [vmem:[#allocation1] sm:$0xff pattern:$0x73625140]
        %v204 = vld.sshfl [vmem:[#allocation1 + $0x8] sm:$0xff pattern:$0x73625140]
        %v207 = vsub.f32 %v193, %v203
        %v208 = vsub.f32 %v201, %v204
        %v210 = vperm.slane %v179, 0
        %v211 = vperm.slane %v179, 1
        %v214 = vmul.f32 %v207, %v210
        %v215 = vmul.f32 %v208, %v211
        %v216 = vmul.f32 %v214, %v214
        %v217 = vmul.f32 %v215, %v215
        %vm218 = vcmask 1041408
        %v219 = vsel %vm218, %v216, 0.0
        %v220 = vsel %vm218, %v217, 0.0
        %v221 = vadd.f32 %v219, %v220
        %222 = vadd.xlane.f32.xlu0 %v221
        %v223 = vpop.xlane.xlu0 %222
        %v224 = vrot.slane %v223, 4
        %v225 = vadd.f32 %v223, %v224
        %v226 = vrot.slane %v225, 2
        %v227 = vadd.f32 %v225, %v226
        %v228 = vrot.slane %v227, 1
        %v229 = vadd.f32 %v227, %v228
        %s230 = vtos %v229
        %v231 = vstv %s230
        %v232 = vadd.f32 %v231, 0.0
        %233 = vst [vmem:[#allocation1] ss:$4 sm:$0xff] %v183
        %v234 = vld.sshfl [vmem:[#allocation1] sm:$0xff pattern:$0x73625140]
        %v235 = vld.sshfl [vmem:[#allocation1 + $0x8] sm:$0xff pattern:$0x73625140]
        %236 = vrot.lane.b32.xlu0 %v234, 112
        %v237 = vpop.permute.xlu0 %236
        %238 = vrot.lane.b32.xlu0 %v235, 112
        %v239 = vpop.permute.xlu0 %238
        %vm240 = vcmask 916480
        %v241 = vsel %vm240, %v237, %v239
        %244 = vst [vmem:[#allocation1] ss:$4 sm:$0xff] %v183
        %v245 = vld.sshfl [vmem:[#allocation1] sm:$0xff pattern:$0x73625140]
        %246 = vrot.lane.b32.xlu0 %v245, 112
        %v247 = vpop.permute.xlu0 %246
        %v249 = vsel %vm240, %v239, %v247
        %250 = vst [vmem:[#allocation1] ss:$4 sm:$0xff] %v183
        %v251 = vld.sshfl [vmem:[#allocation1] sm:$0xff pattern:$0x73625140]
        %v252 = vld.sshfl [vmem:[#allocation1 + $0x8] sm:$0xff pattern:$0x73625140]
        %v255 = vsub.f32 %v241, %v251
        %v256 = vsub.f32 %v249, %v252
        %v258 = vperm.slane %v177, 0
        %v259 = vperm.slane %v177, 1
        %v262 = vmul.f32 %v255, %v258
        %v263 = vmul.f32 %v256, %v259
        %v264 = vmul.f32 %v262, %v262
        %v265 = vmul.f32 %v263, %v263
        %v266 = vsel %vm218, %v264, 0.0
        %v267 = vsel %vm218, %v265, 0.0
        %v268 = vadd.f32 %v266, %v267
        %269 = vadd.xlane.f32.xlu0 %v268
        %v270 = vpop.xlane.xlu0 %269
        %v271 = vrot.slane %v270, 4
        %v272 = vadd.f32 %v270, %v271
        %v273 = vrot.slane %v272, 2
        %v274 = vadd.f32 %v272, %v273
        %v275 = vrot.slane %v274, 1
        %v276 = vadd.f32 %v274, %v275
        %s277 = vtos %v276
        %v278 = vstv %s277
        %v279 = vadd.f32 %v278, 0.0
        %vm280 = vcmask 1040384
        %v281 = vsel %vm280, %v279, %v232
        %282 = vst [vmem:[%s176] sm:$0x3] %v281
        %s283 = sand.u32 %s75, 1
        %s284 = scalar_lea.sflag [#allocation4], %s283
        %s285 = sand.u32 %s75, 1
        %s286 = smul.addr %s285, 2
        %s287 = scalar_lea.vmem [#allocation7], %s286
        // Predicated region
        $region37: #{tpu_custom_call.1} parent=27 // pred_check
          %p288 = pneg %p85
        $region38: #{tpu_custom_call.1} parent=27 // pred_check_branch
          %290 = sbr.rel (%p288) target = $region40
        $region39: #{tpu_custom_call.1} parent=27 // pred_region
          %292 = vsyncadd %s284, 0
          %s293 = smul.addr %s20, 2
          %s294 = scalar_lea.hbm %s2, %s293
          %s296 = sshll.u32 %s287, 4
          %s297 = int_to_ptr.vmem [resolvable:$true] %s296
          %s298 = sshll.u32 %s294, 4
          %s299 = int_to_ptr.hbm [resolvable:$true] %s298
          %301 = dma.vmem_to_hbm [thread:$0]  %s297, 32, %s299, %s284
        $region40: #{tpu_custom_call.1} parent=27 // pred_fallthru
          _
      $region28: #{tpu_custom_call.1} parent=5 // pred_fallthru
        _
      %p302 = scmp.le.s32.totalorder 2, %s15
      // Predicated region
      $region41: #{tpu_custom_call.1} parent=5 // pred_check
        %p303 = pneg %p302
      $region42: #{tpu_custom_call.1} parent=5 // pred_check_branch
        %305 = sbr.rel (%p303) target = $region44
      $region43: #{tpu_custom_call.1} parent=5 // pred_region
        %s306 = ssub.s32 %s15, 2
        // Predicated region
        $region45: #{tpu_custom_call.1} parent=43 // pred_check
          %p307 = pneg %p91
        $region46: #{tpu_custom_call.1} parent=43 // pred_check_branch
          %309 = sbr.rel (%p307) target = $region48
        $region47: #{tpu_custom_call.1} parent=43 // pred_region
          %s310 = sand.u32 %s76, 1
          %s311 = scalar_lea.sflag [#allocation4], %s310
          %s312 = sand.u32 %s76, 1
          %s313 = smul.addr %s312, 2
          %s314 = scalar_lea.vmem [#allocation7], %s313
          %316 = dma.done %s311, 32
        $region48: #{tpu_custom_call.1} parent=43 // pred_fallthru
          _
      $region44: #{tpu_custom_call.1} parent=5 // pred_fallthru
        _
    $region6: #{tpu_custom_call.1} parent=1 // loop_footer
      %s19 = sadd.s32 1, %s15
    $region7: #{tpu_custom_call.1} parent=1 // loop_footer_branch
      %14 = sbr.rel target = $region3
    $region8: #{tpu_custom_call.1} parent=1 // loop_exit
      _
    %317 = vsyncpa [#allocation3], 1
    %s318 = scalar_lea.sflag [#allocation3], 1
    %319 = vsyncpa %s318, 1
    %320 = vsyncpa [#allocation6], 1
    %s321 = scalar_lea.sflag [#allocation6], 1
    %322 = vsyncpa %s321, 1
    %323 = vsyncpa [#allocation4], 1
    %s324 = scalar_lea.sflag [#allocation4], 1
    %325 = vsyncpa %s324, 1

</llo_original>
